<compile_context>
chip_gen: v7x
topology: tpu7x:2x2x1
jax: 0.10.0
libtpu: 0.0.40
codegen_flags: <defaults>
</compile_context>

<pallas_src>
import functools

import jax
import jax.numpy as jnp
from jax import lax
from jax.experimental import pallas as pl
from jax.experimental.pallas import tpu as pltpu

LN_EPS = 1e-12


def _round_up(n: int, m: int) -> int:
    return ((n + m - 1) // m) * m


def _make_bert_output_kernel(h_real: int, mm_dtype, n_split: int):
    """Kernel closure.

    h_real:  unpadded hidden size (LayerNorm statistics are computed over it).
    mm_dtype: dtype the MXU sees for the x tile / weight (e.g. bf16 for f32 models).
    n_split: static split of the row tile (2 => overlap LN epilogue with next matmul).
    """

    def _compute(x, res, w, b, gamma, beta):
        # dense: MXU matmul (bf16 feed when requested), f32 accumulation.
        h = jnp.dot(x.astype(mm_dtype), w, preferred_element_type=jnp.float32)

        # bias + residual add (f32). dropout: eval-mode identity.
        # TODO(synk): training-mode dropout mask via pltpu.prng_random_bits if needed.
        h = h + (res.astype(jnp.float32) + b)

        # LayerNorm over the real last-dim h_real. Padded lanes must be masked out of the
        # variance; padded output lanes end up as gamma_pad(=0)*... + beta_pad(=0) = 0.
        h_pad = h.shape[-1]
        if h_pad == h_real:
            mean = jnp.mean(h, axis=-1, keepdims=True)
            centered = h - mean
            var = jnp.mean(centered * centered, axis=-1, keepdims=True)
        else:
            inv_n = jnp.float32(1.0 / h_real)
            lane = lax.broadcasted_iota(jnp.int32, h.shape, dimension=1)
            mask = lane < h_real
            mean = jnp.sum(h, axis=-1, keepdims=True) * inv_n  # padded lanes of h are 0
            centered = jnp.where(mask, h - mean, 0.0)
            var = jnp.sum(centered * centered, axis=-1, keepdims=True) * inv_n

        normed = centered * lax.rsqrt(var + LN_EPS)
        return normed * gamma + beta

    def kernel(x_ref, res_ref, w_ref, b_ref, gamma_ref, beta_ref, o_ref):
        # x_ref:     (tm, I_pad)    hidden_states row-tile (native dtype)
        # res_ref:   (tm, H_pad)    input_tensor (residual) row-tile
        # w_ref:     (I_pad, H_pad) dense weight, [in, out] layout (mm_dtype, resident)
        # b/gamma/beta_ref: (1, H_pad) f32, resident
        # o_ref:     (tm, H_pad)    output row-tile
        w = w_ref[...]
        b = b_ref[...]
        g = gamma_ref[...]
        be = beta_ref[...]

        tm = x_ref.shape[0]
        half = tm // n_split
        for s in range(n_split):  # static unroll; halves interleave across VLIW slots
            rows = pl.ds(s * half, half)
            out = _compute(x_ref[rows, :], res_ref[rows, :], w, b, g, be)
            o_ref[rows, :] = out.astype(o_ref.dtype)

    return kernel


@functools.partial(jax.jit, static_argnames=("tile_rows", "use_bf16_matmul"))
def bert_output(hidden_states, input_tensor, w, b, gamma, beta, *,
                tile_rows=None, use_bf16_matmul=True):
    """hidden_states: [B, S, I], input_tensor: [B, S, H], w: [I, H] -> [B, S, H]."""
    B, S, I = hidden_states.shape
    H = input_tensor.shape[-1]
    rows = B * S

    # MXU feed dtype: bf16 for f32 models (3-8x matmul throughput, halves weight VMEM).
    if use_bf16_matmul and jnp.dtype(w.dtype) == jnp.dtype(jnp.float32):
        mm_dtype = jnp.bfloat16
    else:
        mm_dtype = w.dtype

    # Lane-dense layout: pad feature dims to multiples of 128 (no-op for real BERT sizes).
    I_pad = _round_up(I, 128)
    H_pad = _round_up(H, 128)

    # Row tiling: tall tiles for the MXU, but guarantee >= 2 grid steps so the v7x megacore
    # can shard the "parallel" axis. No row padding: the ragged last block is handled by
    # Pallas (per-row independent math, OOB writes dropped).
    if tile_rows is None:
        tile_rows = 256 if jnp.dtype(hidden_states.dtype).itemsize == 4 else 512
    tm = min(tile_rows, _round_up(pl.cdiv(rows, 2), 8))
    tm = max(_round_up(tm, 8), 8)
    n_split = 2 if (tm % 16 == 0 and tm >= 16) else 1
    grid = (pl.cdiv(rows, tm),)

    x2 = hidden_states.reshape(rows, I)
    r2 = input_tensor.reshape(rows, H)
    if I_pad != I:
        x2 = jnp.pad(x2, ((0, 0), (0, I_pad - I)))
    if H_pad != H:
        r2 = jnp.pad(r2, ((0, 0), (0, H_pad - H)))
    w_p = jnp.pad(w, ((0, I_pad - I), (0, H_pad - H))).astype(mm_dtype)
    b_p = jnp.pad(b, (0, H_pad - H)).astype(jnp.float32).reshape(1, H_pad)
    g_p = jnp.pad(gamma, (0, H_pad - H)).astype(jnp.float32).reshape(1, H_pad)
    be_p = jnp.pad(beta, (0, H_pad - H)).astype(jnp.float32).reshape(1, H_pad)

    out_dtype = hidden_states.dtype  # NOTE: result is emitted in the activation dtype.

    # VMEM budget: resident weight + double-buffered x/res/out tiles + f32 intermediates,
    # capped at 48 MiB (headroom on v7x's 64 MiB per-TC VMEM).
    itemsize = lambda dt: jnp.dtype(dt).itemsize
    bytes_w = I_pad * H_pad * itemsize(mm_dtype)
    bytes_x = tm * I_pad * itemsize(hidden_states.dtype)
    bytes_r = tm * H_pad * itemsize(input_tensor.dtype)
    bytes_o = tm * H_pad * itemsize(out_dtype)
    bytes_params = 3 * H_pad * 4
    bytes_interm = 4 * tm * H_pad * 4
    needed = bytes_w + 2 * (bytes_x + bytes_r + bytes_o) + 2 * bytes_params + bytes_interm
    vmem_limit = int(min(max(needed + (4 << 20), 32 << 20), 48 << 20))

    const = pl.Buffered(1)  # grid-invariant operands: single-buffer (no re-DMA needed)

    out2 = pl.pallas_call(
        _make_bert_output_kernel(H, mm_dtype, n_split),
        out_shape=jax.ShapeDtypeStruct((rows, H_pad), out_dtype),
        grid_spec=pltpu.PrefetchScalarGridSpec(
            num_scalar_prefetch=0,
            grid=grid,
            in_specs=[
                pl.BlockSpec((tm, I_pad), lambda i: (i, 0)),        # hidden_states tile
                pl.BlockSpec((tm, H_pad), lambda i: (i, 0)),        # residual tile
                pl.BlockSpec((I_pad, H_pad), lambda i: (0, 0),      # dense weight (resident)
                             pipeline_mode=const),
                pl.BlockSpec((1, H_pad), lambda i: (0, 0),          # dense bias (f32)
                             pipeline_mode=const),
                pl.BlockSpec((1, H_pad), lambda i: (0, 0),          # LN gamma (f32)
                             pipeline_mode=const),
                pl.BlockSpec((1, H_pad), lambda i: (0, 0),          # LN beta (f32)
                             pipeline_mode=const),
            ],
            out_specs=pl.BlockSpec((tm, H_pad), lambda i: (i, 0)),
        ),
        compiler_params=pltpu.CompilerParams(
            dimension_semantics=("parallel",),
            vmem_limit_bytes=vmem_limit,
        ),
    )(x2, r2, w_p, b_p, g_p, be_p)

    if H_pad != H:
        out2 = out2[:, :H]
    return out2.reshape(B, S, H)


def reference(hidden_states, input_tensor, w, b, gamma, beta):
    h = jnp.einsum("bsi,ih->bsh", hidden_states, w,
                   precision=lax.Precision.HIGHEST) + b
    h = h + input_tensor
    mean = jnp.mean(h, axis=-1, keepdims=True)
    var = jnp.mean((h - mean) ** 2, axis=-1, keepdims=True)
    return ((h - mean) / jnp.sqrt(var + LN_EPS)) * gamma + beta


if __name__ == "__main__":
    # config: intermediate_size=64, hidden_size=32, batch=2, seq=8
    B, S, I, H = 2, 8, 64, 32

    key = jax.random.PRNGKey(0)
    k1, k2, k3, k4 = jax.random.split(key, 4)

    hidden_states = jax.random.normal(k1, (B, S, I), dtype=jnp.float32)
    input_tensor = jax.random.normal(k2, (B, S, H), dtype=jnp.float32)

    # Parameters (deterministic init). PyTorch nn.Linear stores weight as [H, I];
    # we keep it as [I, H] (transposed) for the kernel's x @ W convention.
    w = jax.random.normal(k3, (I, H), dtype=jnp.float32) * (1.0 / jnp.sqrt(I))
    b = jax.random.normal(k4, (H,), dtype=jnp.float32) * 0.02
    gamma = jnp.ones((H,), dtype=jnp.float32)
    beta = jnp.zeros((H,), dtype=jnp.float32)

    ref = reference(hidden_states, input_tensor, w, b, gamma, beta)

    # 1) Exact-precision path (f32 MXU feed): tight tolerance vs reference.
    out_f32 = bert_output(hidden_states, input_tensor, w, b, gamma, beta,
                          use_bf16_matmul=False)
    out_f32 = jax.block_until_ready(out_f32)
    assert out_f32.shape == (B, S, H)
    assert jnp.allclose(out_f32, ref, atol=1e-4, rtol=1e-4), "f32-path mismatch vs reference"

    # 2) Performance path (bf16 MXU feed for the f32 model): relaxed tolerance.
    out_bf16 = bert_output(hidden_states, input_tensor, w, b, gamma, beta,
                           use_bf16_matmul=True)
    out_bf16 = jax.block_until_ready(out_bf16)
    assert out_bf16.shape == (B, S, H)
    assert jnp.allclose(out_bf16, ref, atol=5e-2, rtol=5e-2), "bf16-path mismatch vs reference"

    print("KERNEL_OK")
</pallas_src>

<mosaic_0001>
module attributes {stable_mosaic.version = 11 : i64} {
  func.func @kernel(%arg0: i32, %arg1: memref<8x128xf32, #tpu.memory_space<vmem>>, %arg2: memref<8x128xf32, #tpu.memory_space<vmem>>, %arg3: memref<128x128xf32, #tpu.memory_space<vmem>>, %arg4: memref<1x128xf32, #tpu.memory_space<vmem>>, %arg5: memref<1x128xf32, #tpu.memory_space<vmem>>, %arg6: memref<1x128xf32, #tpu.memory_space<vmem>>, %arg7: memref<8x128xf32, #tpu.memory_space<vmem>>) attributes {dimension_semantics = [#tpu.dimension_semantics<parallel>], iteration_bounds = array<i64: 2>, scalar_prefetch = 0 : i64, scratch_operands = 0 : i64, tpu.core_type = #tpu.core_type<tc>, window_params = [{transform_indices = @transform_0, window_bounds = array<i64: 8, 128>}, {transform_indices = @transform_1, window_bounds = array<i64: 8, 128>}, {pipeline_mode = #tpu.pipeline_mode<synchronous>, transform_indices = @transform_2, window_bounds = array<i64: 128, 128>}, {pipeline_mode = #tpu.pipeline_mode<synchronous>, transform_indices = @transform_3, window_bounds = array<i64: 1, 128>}, {pipeline_mode = #tpu.pipeline_mode<synchronous>, transform_indices = @transform_4, window_bounds = array<i64: 1, 128>}, {pipeline_mode = #tpu.pipeline_mode<synchronous>, transform_indices = @transform_5, window_bounds = array<i64: 1, 128>}, {transform_indices = @transform_6, window_bounds = array<i64: 8, 128>}]} {
    %c0 = arith.constant 0 : index
    %c0_0 = arith.constant 0 : index
    %0 = vector.load %arg3[%c0, %c0_0] : memref<128x128xf32, #tpu.memory_space<vmem>>, vector<128x128xf32>
    %c0_1 = arith.constant 0 : index
    %c0_2 = arith.constant 0 : index
    %1 = vector.load %arg4[%c0_1, %c0_2] : memref<1x128xf32, #tpu.memory_space<vmem>>, vector<1x128xf32>
    %c0_3 = arith.constant 0 : index
    %c0_4 = arith.constant 0 : index
    %2 = vector.load %arg5[%c0_3, %c0_4] : memref<1x128xf32, #tpu.memory_space<vmem>>, vector<1x128xf32>
    %c0_5 = arith.constant 0 : index
    %c0_6 = arith.constant 0 : index
    %3 = vector.load %arg6[%c0_5, %c0_6] : memref<1x128xf32, #tpu.memory_space<vmem>>, vector<1x128xf32>
    %c0_7 = arith.constant 0 : index
    %c0_8 = arith.constant 0 : index
    %4 = vector.load %arg1[%c0_7, %c0_8] : memref<8x128xf32, #tpu.memory_space<vmem>>, vector<8x128xf32>
    %c0_9 = arith.constant 0 : index
    %c0_10 = arith.constant 0 : index
    %5 = vector.load %arg2[%c0_9, %c0_10] : memref<8x128xf32, #tpu.memory_space<vmem>>, vector<8x128xf32>
    %cst = arith.constant dense<0.000000e+00> : vector<8x128xf32>
    %6 = tpu.matmul %4, %0, %cst {dimension_numbers = #tpu.dot_dimension_numbers<[1], [0], [0], [1], [0, 0, 1, 1], [], []>} : vector<8x128xf32>, vector<128x128xf32>, vector<8x128xf32> -> vector<8x128xf32>
    %7 = vector.broadcast %1 : vector<1x128xf32> to vector<8x128xf32>
    %8 = arith.addf %5, %7 : vector<8x128xf32>
    %9 = arith.addf %6, %8 : vector<8x128xf32>
    %10 = tpu.iota {dimensions = array<i32: 1>} : vector<8x128xi32>
    %c32_i32 = arith.constant 32 : i32
    %11 = vector.broadcast %c32_i32 : i32 to vector<8x128xi32>
    %12 = arith.cmpi slt, %10, %11 : vector<8x128xi32>
    %cst_11 = arith.constant dense<0.000000e+00> : vector<8xf32>
    %13 = vector.multi_reduction <add>, %9, %cst_11 [1] : vector<8x128xf32> to vector<8xf32>
    %14 = vector.shape_cast %13 : vector<8xf32> to vector<8x1xf32>
    %cst_12 = arith.constant 3.125000e-02 : f32
    %15 = vector.broadcast %cst_12 : f32 to vector<8x1xf32>
    %16 = arith.mulf %14, %15 : vector<8x1xf32>
    %17 = vector.broadcast %16 : vector<8x1xf32> to vector<8x128xf32>
    %18 = arith.subf %9, %17 : vector<8x128xf32>
    %cst_13 = arith.constant 0.000000e+00 : f32
    %19 = vector.broadcast %cst_13 : f32 to vector<8x128xf32>
    %20 = arith.select %12, %18, %19 : vector<8x128xi1>, vector<8x128xf32>
    %21 = arith.mulf %20, %20 : vector<8x128xf32>
    %cst_14 = arith.constant dense<0.000000e+00> : vector<8xf32>
    %22 = vector.multi_reduction <add>, %21, %cst_14 [1] : vector<8x128xf32> to vector<8xf32>
    %23 = vector.shape_cast %22 : vector<8xf32> to vector<8x1xf32>
    %cst_15 = arith.constant 3.125000e-02 : f32
    %24 = vector.broadcast %cst_15 : f32 to vector<8x1xf32>
    %25 = arith.mulf %23, %24 : vector<8x1xf32>
    %cst_16 = arith.constant 9.99999996E-13 : f32
    %26 = vector.broadcast %cst_16 : f32 to vector<8x1xf32>
    %27 = arith.addf %25, %26 : vector<8x1xf32>
    %28 = math.rsqrt %27 : vector<8x1xf32>
    %29 = vector.broadcast %28 : vector<8x1xf32> to vector<8x128xf32>
    %30 = arith.mulf %20, %29 : vector<8x128xf32>
    %31 = vector.broadcast %2 : vector<1x128xf32> to vector<8x128xf32>
    %32 = arith.mulf %30, %31 : vector<8x128xf32>
    %33 = vector.broadcast %3 : vector<1x128xf32> to vector<8x128xf32>
    %34 = arith.addf %32, %33 : vector<8x128xf32>
    %c0_17 = arith.constant 0 : index
    %c0_18 = arith.constant 0 : index
    %35 = vector.load %arg7[%c0_17, %c0_18] : memref<8x128xf32, #tpu.memory_space<vmem>>, vector<8x128xf32>
    tpu.vector_store %arg7[%c0_17, %c0_18], %34 {strides = array<i32>} : memref<8x128xf32, #tpu.memory_space<vmem>>, vector<8x128xf32>,
    return
  }
  func.func @transform_0(%arg0: i32) -> (i32, i32) {
    %c0_i32 = arith.constant 0 : i32
    %c0_i32_0 = arith.constant 0 : i32
    return %arg0, %c0_i32 : i32, i32
  }
  func.func @transform_1(%arg0: i32) -> (i32, i32) {
    %c0_i32 = arith.constant 0 : i32
    %c0_i32_0 = arith.constant 0 : i32
    return %arg0, %c0_i32 : i32, i32
  }
  func.func @transform_2(%arg0: i32) -> (i32, i32) {
    %c0_i32 = arith.constant 0 : i32
    %c0_i32_0 = arith.constant 0 : i32
    %c0_i32_1 = arith.constant 0 : i32
    return %c0_i32, %c0_i32_0 : i32, i32
  }
  func.func @transform_3(%arg0: i32) -> (i32, i32) {
    %c0_i32 = arith.constant 0 : i32
    %c0_i32_0 = arith.constant 0 : i32
    %c0_i32_1 = arith.constant 0 : i32
    return %c0_i32, %c0_i32_0 : i32, i32
  }
  func.func @transform_4(%arg0: i32) -> (i32, i32) {
    %c0_i32 = arith.constant 0 : i32
    %c0_i32_0 = arith.constant 0 : i32
    %c0_i32_1 = arith.constant 0 : i32
    return %c0_i32, %c0_i32_0 : i32, i32
  }
  func.func @transform_5(%arg0: i32) -> (i32, i32) {
    %c0_i32 = arith.constant 0 : i32
    %c0_i32_0 = arith.constant 0 : i32
    %c0_i32_1 = arith.constant 0 : i32
    return %c0_i32, %c0_i32_0 : i32, i32
  }
  func.func @transform_6(%arg0: i32) -> (i32, i32) {
    %c0_i32 = arith.constant 0 : i32
    %c0_i32_0 = arith.constant 0 : i32
    return %arg0, %c0_i32 : i32, i32
  }
}

</mosaic_0001>

<llo_original>
// kernel: bert_output.1
$region0: #{bert_output.1}
  #allocation0 [shape = 'u32[]', space=smem, size = 0x4, offset = 0x4, fixed_abs, tag = 'smem constant byte address 0x4 - core index']
  #allocation1 [shape = 'u32[144,128]{1,0:T(1,128)}', space=vmem, size = 0x12000, scoped, tag = 'internal scratch']
  %s0 = inlined_call_operand.vmem [shape: f32[16,128], index: 0, kind: input, shape index: {}]
  %s1 = inlined_call_operand.vmem [shape: f32[16,128], index: 1, kind: input, shape index: {}]
  %s2 = inlined_call_operand.vmem [shape: f32[128,128], index: 2, kind: input, shape index: {}]
  %s3 = inlined_call_operand.vmem [shape: f32[1,128], index: 3, kind: input, shape index: {}]
  %s4 = inlined_call_operand.vmem [shape: f32[1,128], index: 4, kind: input, shape index: {}]
  %s5 = inlined_call_operand.vmem [shape: f32[1,128], index: 5, kind: input, shape index: {}]
  %s6 = inlined_call_operand.vmem [shape: f32[16,128], index: 6, kind: output, shape index: {}]
  %s7 = sld [smem:[#allocation0]]
  $region57: #{bert_output.1} parent=0
    _
  %s9 = ssub.s32 1, %s7
  %s10 = scalar_select 0, %s9, %s7
  loop: start=0, step=1, limit=4
  $region2: #{bert_output.1} parent=0 // loop_pre_header
    _
  $region3: #{bert_output.1} parent=0 // loop_header
    %s12 = sphi 0, %s16
    %p13 = scmp.ge.s32.totalorder %s12, 4
    %s22 = sphi 0, %s24
    %s25 = sphi 0, %s22
    %s26 = sphi 0, %s25
    %s42 = sphi 0, %s26
    %s48 = sphi 0, %s50
    %s51 = sphi 0, %s48
    %s52 = sphi 0, %s51
    %s68 = sphi 0, %s52
    %s72 = sphi 0, %s72
    %s74 = sphi 0, %s72
    %s75 = sphi 0, %s74
    %s89 = sphi 0, %s75
    %s93 = sphi 0, %s93
    %s95 = sphi 0, %s93
    %s96 = sphi 0, %s95
    %s110 = sphi 0, %s96
    %s114 = sphi 0, %s114
    %s116 = sphi 0, %s114
    %s117 = sphi 0, %s116
    %s131 = sphi 0, %s117
    %s135 = sphi 0, %s135
    %s137 = sphi 0, %s135
    %s138 = sphi 0, %s137
    %s152 = sphi 0, %s138
    %s158 = sphi 0, %s160
    %s161 = sphi 0, %s158
    %s162 = sphi 0, %s161
    %s178 = sphi 0, %s162
  $region4: #{bert_output.1} parent=0 // loop_header_branch
    %15 = sbr.rel (%p13) target = $region8
  $region5: #{bert_output.1} parent=0 // loop_body
    %s17 = ssub.s32 %s12, 1
    %s18 = ssub.s32 %s12, 2
    %s19 = sadd.s32 %s12, 1
    %s20 = ssub.s32 %s12, %s19
    %p21 = scmp.eq.s32.totalorder %s20, 0
    %s23 = sadd.s32 %s22, 1
    %s24 = scalar_select %p21, %s22, %s23
    %p27 = pneg %p21
    %p28 = scmp.eq.s32.totalorder %s12, 1
    %p29 = por %p27, %p28
    %p30 = scmp.ne.s32.totalorder %s22, %s25
    %p31 = scmp.eq.s32.totalorder %s12, 0
    %p32 = por %p30, %p31
    %p33 = scmp.ne.s32.totalorder %s22, %s25
    %p34 = scmp.eq.s32.totalorder %s17, 1
    %p35 = por %p33, %p34
    %p36 = scmp.ne.s32.totalorder %s25, %s26
    %p37 = scmp.eq.s32.totalorder %s17, 0
    %p38 = por %p36, %p37
    %p39 = scmp.ne.s32.totalorder %s25, %s26
    %p40 = scmp.eq.s32.totalorder %s18, 1
    %p41 = por %p39, %p40
    %p43 = scmp.ne.s32.totalorder %s26, %s42
    %p44 = scmp.eq.s32.totalorder %s18, 0
    %p45 = por %p43, %p44
    %s46 = ssub.s32 %s12, %s19
    %p47 = scmp.eq.s32.totalorder %s46, 0
    %s49 = sadd.s32 %s48, 1
    %s50 = scalar_select %p47, %s48, %s49
    %p53 = pneg %p47
    %p54 = scmp.eq.s32.totalorder %s12, 1
    %p55 = por %p53, %p54
    %p56 = scmp.ne.s32.totalorder %s48, %s51
    %p57 = scmp.eq.s32.totalorder %s12, 0
    %p58 = por %p56, %p57
    %p59 = scmp.ne.s32.totalorder %s48, %s51
    %p60 = scmp.eq.s32.totalorder %s17, 1
    %p61 = por %p59, %p60
    %p62 = scmp.ne.s32.totalorder %s51, %s52
    %p63 = scmp.eq.s32.totalorder %s17, 0
    %p64 = por %p62, %p63
    %p65 = scmp.ne.s32.totalorder %s51, %s52
    %p66 = scmp.eq.s32.totalorder %s18, 1
    %p67 = por %p65, %p66
    %p69 = scmp.ne.s32.totalorder %s52, %s68
    %p70 = scmp.eq.s32.totalorder %s18, 0
    %p71 = por %p69, %p70
    %s73 = sadd.s32 %s72, 1
    %p76 = scmp.eq.s32.totalorder %s12, 1
    %p77 = scmp.ne.s32.totalorder %s72, %s74
    %p78 = scmp.eq.s32.totalorder %s12, 0
    %p79 = por %p77, %p78
    %p80 = scmp.ne.s32.totalorder %s72, %s74
    %p81 = scmp.eq.s32.totalorder %s17, 1
    %p82 = por %p80, %p81
    %p83 = scmp.ne.s32.totalorder %s74, %s75
    %p84 = scmp.eq.s32.totalorder %s17, 0
    %p85 = por %p83, %p84
    %p86 = scmp.ne.s32.totalorder %s74, %s75
    %p87 = scmp.eq.s32.totalorder %s18, 1
    %p88 = por %p86, %p87
    %p90 = scmp.ne.s32.totalorder %s75, %s89
    %p91 = scmp.eq.s32.totalorder %s18, 0
    %p92 = por %p90, %p91
    %s94 = sadd.s32 %s93, 1
    %p97 = scmp.eq.s32.totalorder %s12, 1
    %p98 = scmp.ne.s32.totalorder %s93, %s95
    %p99 = scmp.eq.s32.totalorder %s12, 0
    %p100 = por %p98, %p99
    %p101 = scmp.ne.s32.totalorder %s93, %s95
    %p102 = scmp.eq.s32.totalorder %s17, 1
    %p103 = por %p101, %p102
    %p104 = scmp.ne.s32.totalorder %s95, %s96
    %p105 = scmp.eq.s32.totalorder %s17, 0
    %p106 = por %p104, %p105
    %p107 = scmp.ne.s32.totalorder %s95, %s96
    %p108 = scmp.eq.s32.totalorder %s18, 1
    %p109 = por %p107, %p108
    %p111 = scmp.ne.s32.totalorder %s96, %s110
    %p112 = scmp.eq.s32.totalorder %s18, 0
    %p113 = por %p111, %p112
    %s115 = sadd.s32 %s114, 1
    %p118 = scmp.eq.s32.totalorder %s12, 1
    %p119 = scmp.ne.s32.totalorder %s114, %s116
    %p120 = scmp.eq.s32.totalorder %s12, 0
    %p121 = por %p119, %p120
    %p122 = scmp.ne.s32.totalorder %s114, %s116
    %p123 = scmp.eq.s32.totalorder %s17, 1
    %p124 = por %p122, %p123
    %p125 = scmp.ne.s32.totalorder %s116, %s117
    %p126 = scmp.eq.s32.totalorder %s17, 0
    %p127 = por %p125, %p126
    %p128 = scmp.ne.s32.totalorder %s116, %s117
    %p129 = scmp.eq.s32.totalorder %s18, 1
    %p130 = por %p128, %p129
    %p132 = scmp.ne.s32.totalorder %s117, %s131
    %p133 = scmp.eq.s32.totalorder %s18, 0
    %p134 = por %p132, %p133
    %s136 = sadd.s32 %s135, 1
    %p139 = scmp.eq.s32.totalorder %s12, 1
    %p140 = scmp.ne.s32.totalorder %s135, %s137
    %p141 = scmp.eq.s32.totalorder %s12, 0
    %p142 = por %p140, %p141
    %p143 = scmp.ne.s32.totalorder %s135, %s137
    %p144 = scmp.eq.s32.totalorder %s17, 1
    %p145 = por %p143, %p144
    %p146 = scmp.ne.s32.totalorder %s137, %s138
    %p147 = scmp.eq.s32.totalorder %s17, 0
    %p148 = por %p146, %p147
    %p149 = scmp.ne.s32.totalorder %s137, %s138
    %p150 = scmp.eq.s32.totalorder %s18, 1
    %p151 = por %p149, %p150
    %p153 = scmp.ne.s32.totalorder %s138, %s152
    %p154 = scmp.eq.s32.totalorder %s18, 0
    %p155 = por %p153, %p154
    %s156 = ssub.s32 %s12, %s19
    %p157 = scmp.eq.s32.totalorder %s156, 0
    %s159 = sadd.s32 %s158, 1
    %s160 = scalar_select %p157, %s158, %s159
    %p163 = pneg %p157
    %p164 = scmp.eq.s32.totalorder %s12, 1
    %p165 = por %p163, %p164
    %p166 = scmp.ne.s32.totalorder %s158, %s161
    %p167 = scmp.eq.s32.totalorder %s12, 0
    %p168 = por %p166, %p167
    %p169 = scmp.ne.s32.totalorder %s158, %s161
    %p170 = scmp.eq.s32.totalorder %s17, 1
    %p171 = por %p169, %p170
    %p172 = scmp.ne.s32.totalorder %s161, %s162
    %p173 = scmp.eq.s32.totalorder %s17, 0
    %p174 = por %p172, %p173
    %p175 = scmp.ne.s32.totalorder %s161, %s162
    %p176 = scmp.eq.s32.totalorder %s18, 1
    %p177 = por %p175, %p176
    %p179 = scmp.ne.s32.totalorder %s162, %s178
    %p180 = scmp.eq.s32.totalorder %s18, 0
    %p181 = por %p179, %p180
    %p182 = scmp.le.s32.totalorder 1, %s12
    %p183 = scmp.lt.s32.totalorder %s12, 3
    %p184 = pnand %p182, %p183
    %p185 = pneg %p184
    // Predicated region
    $region9: #{bert_output.1} parent=5 // pred_check
      _
    $region10: #{bert_output.1} parent=5 // pred_check_branch
      %187 = sbr.rel (%p184) target = $region12
    $region11: #{bert_output.1} parent=5 // pred_region
      %s188 = ssub.s32 %s12, 1
      // Predicated region
      $region13: #{bert_output.1} parent=11 // pred_check
        %p189 = pneg %p85
      $region14: #{bert_output.1} parent=11 // pred_check_branch
        %191 = sbr.rel (%p189) target = $region16
      $region15: #{bert_output.1} parent=11 // pred_region
        _
      $region16: #{bert_output.1} parent=11 // pred_fallthru
        _
      // Predicated region
      $region17: #{bert_output.1} parent=11 // pred_check
        %p192 = pneg %p106
      $region18: #{bert_output.1} parent=11 // pred_check_branch
        %194 = sbr.rel (%p192) target = $region20
      $region19: #{bert_output.1} parent=11 // pred_region
        _
      $region20: #{bert_output.1} parent=11 // pred_fallthru
        _
      // Predicated region
      $region21: #{bert_output.1} parent=11 // pred_check
        %p195 = pneg %p127
      $region22: #{bert_output.1} parent=11 // pred_check_branch
        %197 = sbr.rel (%p195) target = $region24
      $region23: #{bert_output.1} parent=11 // pred_region
        _
      $region24: #{bert_output.1} parent=11 // pred_fallthru
        _
      // Predicated region
      $region25: #{bert_output.1} parent=11 // pred_check
        %p198 = pneg %p148
      $region26: #{bert_output.1} parent=11 // pred_check_branch
        %200 = sbr.rel (%p198) target = $region28
      $region27: #{bert_output.1} parent=11 // pred_region
        _
      $region28: #{bert_output.1} parent=11 // pred_fallthru
        _
    $region12: #{bert_output.1} parent=5 // pred_fallthru
      _
    %p201 = scmp.lt.s32.totalorder %s12, 2
    // Predicated region
    $region29: #{bert_output.1} parent=5 // pred_check
      %p202 = pneg %p201
    $region30: #{bert_output.1} parent=5 // pred_check_branch
      %204 = sbr.rel (%p202) target = $region32
    $region31: #{bert_output.1} parent=5 // pred_region
      // Predicated region
      $region33: #{bert_output.1} parent=31 // pred_check
        %p205 = pneg %p32
      $region34: #{bert_output.1} parent=31 // pred_check_branch
        %207 = sbr.rel (%p205) target = $region36
      $region35: #{bert_output.1} parent=31 // pred_region
        %p208 = scmp.lt.s32.totalorder %s12, 1
        %s209 = scalar_select %p208, %s12, 1
        %s210 = smul.addr %s209, 8
        %s211 = scalar_lea.vmem %s0, %s210
      $region36: #{bert_output.1} parent=31 // pred_fallthru
        _
      // Predicated region
      $region37: #{bert_output.1} parent=31 // pred_check
        %p212 = pneg %p58
      $region38: #{bert_output.1} parent=31 // pred_check_branch
        %214 = sbr.rel (%p212) target = $region40
      $region39: #{bert_output.1} parent=31 // pred_region
        %p215 = scmp.lt.s32.totalorder %s12, 1
        %s216 = scalar_select %p215, %s12, 1
        %s217 = smul.addr %s216, 8
        %s218 = scalar_lea.vmem %s1, %s217
      $region40: #{bert_output.1} parent=31 // pred_fallthru
        _
    $region32: #{bert_output.1} parent=5 // pred_fallthru
      _
    %p219 = scmp.le.s32.totalorder 1, %s12
    %p220 = scmp.lt.s32.totalorder %s12, 3
    %p221 = pnand %p219, %p220
    %p222 = pneg %p221
    // Predicated region
    $region41: #{bert_output.1} parent=5 // pred_check
      _
    $region42: #{bert_output.1} parent=5 // pred_check_branch
      %224 = sbr.rel (%p221) target = $region44
    $region43: #{bert_output.1} parent=5 // pred_region
      %s225 = ssub.s32 %s12, 1
      %p226 = scmp.lt.s32.totalorder %s17, 1
      %s227 = scalar_select %p226, %s17, 1
      %s228 = smul.addr %s227, 8
      %s229 = scalar_lea.vmem %s0, %s228
      %p230 = pneg %p38
      %p231 = pneg %p35
      %p232 = scmp.lt.s32.totalorder %s17, 1
      %s233 = scalar_select %p232, %s17, 1
      %s234 = smul.addr %s233, 8
      %s235 = scalar_lea.vmem %s1, %s234
      %p236 = pneg %p64
      %p237 = pneg %p61
      %p238 = pneg %p85
      %p239 = pneg %p82
      %p240 = pneg %p106
      %p241 = pneg %p103
      %p242 = pneg %p127
      %p243 = pneg %p124
      %p244 = pneg %p148
      %p245 = pneg %p145
      %p246 = pneg %p174
      %p247 = pneg %p171
      %p248 = scmp.lt.s32.totalorder %s17, 1
      %s249 = scalar_select %p248, %s17, 1
      %s250 = smul.addr %s249, 8
      %s251 = scalar_lea.vmem %s6, %s250
      %p252 = scmp.lt.s32.totalorder %s17, 1
      %s253 = scalar_select %p252, %s17, 1
      %s254 = smul.addr %s253, 8
      %s255 = scalar_lea.vmem %s0, %s254
      %p256 = scmp.lt.s32.totalorder %s17, 1
      %s257 = scalar_select %p256, %s17, 1
      %s258 = smul.addr %s257, 8
      %s259 = scalar_lea.vmem %s1, %s258
      %p260 = scmp.lt.s32.totalorder %s17, 1
      %s261 = scalar_select %p260, %s17, 1
      %s262 = smul.addr %s261, 8
      %s263 = scalar_lea.vmem %s6, %s262
      %v264 = vld [vmem:[%s2] sm:$0xff]
      %v265 = vld [vmem:[%s2 + $0x8] sm:$0xff]
      %v266 = vld [vmem:[%s2 + $0x10] sm:$0xff]
      %v267 = vld [vmem:[%s2 + $0x18] sm:$0xff]
      %v268 = vld [vmem:[%s2 + $0x20] sm:$0xff]
      %v269 = vld [vmem:[%s2 + $0x28] sm:$0xff]
      %v270 = vld [vmem:[%s2 + $0x30] sm:$0xff]
      %v271 = vld [vmem:[%s2 + $0x38] sm:$0xff]
      %v272 = vld [vmem:[%s2 + $0x40] sm:$0xff]
      %v273 = vld [vmem:[%s2 + $0x48] sm:$0xff]
      %v274 = vld [vmem:[%s2 + $0x50] sm:$0xff]
      %v275 = vld [vmem:[%s2 + $0x58] sm:$0xff]
      %v276 = vld [vmem:[%s2 + $0x60] sm:$0xff]
      %v277 = vld [vmem:[%s2 + $0x68] sm:$0xff]
      %v278 = vld [vmem:[%s2 + $0x70] sm:$0xff]
      %v279 = vld [vmem:[%s2 + $0x78] sm:$0xff]
      %v280 = vld [vmem:[%s3] sm:$0x1]
      %v281 = vld [vmem:[%s4] sm:$0x1]
      %v282 = vld [vmem:[%s5] sm:$0x1]
      %v283 = vld [vmem:[%s255] sm:$0xff]
      %v284 = vld [vmem:[%s259] sm:$0xff]
      %v286 = vlaneseq
      %v287 = vshrl.u32 %v286, 7
      %v288 = vsub.s32 0, %v287
      %v289 = vrot.slane %v280, %v288
      %v291 = vadd.f32 %v284, %v289
      %292 = vmatprep.subr.mxu0 0.0
      %293 = vmatpush1.msra.mxu0 %v264
      %294 = vmatprep.subr.mxu0 0.0
      %295 = vmatpush1.msra.mxu0 %v265
      %296 = vmatprep.subr.mxu0 0.0
      %297 = vmatpush1.msra.mxu0 %v266
      %298 = vmatprep.subr.mxu0 0.0
      %299 = vmatpush1.msra.mxu0 %v267
      %300 = vmatprep.subr.mxu0 0.0
      %301 = vmatpush1.msra.mxu0 %v268
      %302 = vmatprep.subr.mxu0 0.0
      %303 = vmatpush1.msra.mxu0 %v269
      %304 = vmatprep.subr.mxu0 0.0
      %305 = vmatpush1.msra.mxu0 %v270
      %306 = vmatprep.subr.mxu0 0.0
      %307 = vmatpush1.msra.mxu0 %v271
      %308 = vmatprep.subr.mxu0 0.0
      %309 = vmatpush1.msra.mxu0 %v272
      %310 = vmatprep.subr.mxu0 0.0
      %311 = vmatpush1.msra.mxu0 %v273
      %312 = vmatprep.subr.mxu0 0.0
      %313 = vmatpush1.msra.mxu0 %v274
      %314 = vmatprep.subr.mxu0 0.0
      %315 = vmatpush1.msra.mxu0 %v275
      %316 = vmatprep.subr.mxu0 0.0
      %317 = vmatpush1.msra.mxu0 %v276
      %318 = vmatprep.subr.mxu0 0.0
      %319 = vmatpush1.msra.mxu0 %v277
      %320 = vmatprep.subr.mxu0 0.0
      %321 = vmatpush1.msra.mxu0 %v278
      %322 = vmatprep.subr.mxu0 0.0
      %323 = vmatpush1.msra.mxu0 %v279
      %324 = vmatprep.subr.mxu0 0.0
      %325 = vmatpush1.msra.mxu0 0.0
      %326 = vmatprep.subr.mxu0 0.0
      %327 = vmatpush1.msra.mxu0 0.0
      %328 = vmatprep.subr.mxu0 0.0
      %329 = vmatpush1.msra.mxu0 0.0
      %330 = vmatprep.subr.mxu0 0.0
      %331 = vmatpush1.msra.mxu0 0.0
      %332 = vmatprep.subr.mxu0 0.0
      %333 = vmatpush1.msra.mxu0 0.0
      %334 = vmatprep.subr.mxu0 0.0
      %335 = vmatpush1.msra.mxu0 0.0
      %336 = vmatprep.subr.mxu0 0.0
      %337 = vmatpush1.msra.mxu0 0.0
      %338 = vmatprep.subr.mxu0 0.0
      %339 = vmatpush1.msra.mxu0 0.0
      %340 = vmatprep.subr.mxu0 0.0
      %341 = vmatpush1.msra.mxu0 0.0
      %342 = vmatprep.subr.mxu0 0.0
      %343 = vmatpush1.msra.mxu0 0.0
      %344 = vmatprep.subr.mxu0 0.0
      %345 = vmatpush1.msra.mxu0 0.0
      %346 = vmatprep.subr.mxu0 0.0
      %347 = vmatpush1.msra.mxu0 0.0
      %348 = vmatprep.subr.mxu0 0.0
      %349 = vmatpush1.msra.mxu0 0.0
      %350 = vmatprep.subr.mxu0 0.0
      %351 = vmatpush1.msra.mxu0 0.0
      %352 = vmatprep.subr.mxu0 0.0
      %353 = vmatpush1.msra.mxu0 0.0
      %354 = vmatprep.subr.mxu0 0.0
      %355 = vmatpush1.msra.mxu0 0.0
      %356 = vmatprep.mubr.f32.mxu0 0.0
      %357 = vmatmul.mubr.f32.gmra.mrb[0].mxu0 %v283
      %v358 = vpop.f32.mrb[0].mxu0
      %v359 = vadd.f32 %v291, %v358
      %v360 = vpop.f32.mrb[0].mxu0
      %361 = vdwg.mxu0
      %v362 = vlaneseq
      %v363 = vand.u32 %v362, 127
      %vm364 = vcmp.lt.s32.totalorder %v363, 32
      %365 = vadd.xlane.f32.xlu0 %v359
      %v366 = vpop.xlane.xlu0 %365
      %v367 = vmul.f32 %v366, 0.03125
      %v368 = vsub.f32 %v359, %v367
      %v369 = vsel %vm364, %v368, 0.0
      %v370 = vmul.f32 %v369, %v369
      %371 = vadd.xlane.f32.xlu0 %v370
      %v372 = vpop.xlane.xlu0 %371
      %v373 = vmul.f32 %v372, 0.03125
      %v374 = vadd.f32 %v373, 1e-12
      %v375 = vrsqrt.pop %v374
      %v376 = vmul.f32 %v369, %v375
      %v378 = vlaneseq
      %v379 = vshrl.u32 %v378, 7
      %v380 = vsub.s32 0, %v379
      %v381 = vrot.slane %v281, %v380
      %v383 = vmul.f32 %v376, %v381
      %v385 = vlaneseq
      %v386 = vshrl.u32 %v385, 7
      %v387 = vsub.s32 0, %v386
      %v388 = vrot.slane %v282, %v387
      %v390 = vadd.f32 %v383, %v388
      %391 = vst [vmem:[%s263] sm:$0xff] %v390
      %p392 = scmp.lt.s32.totalorder %s17, 1
      %s393 = scalar_select %p392, %s17, 1
      %s394 = smul.addr %s393, 8
      %s395 = scalar_lea.vmem %s6, %s394
      // Predicated region
      $region45: #{bert_output.1} parent=43 // pred_check
        %p396 = pneg %p171
      $region46: #{bert_output.1} parent=43 // pred_check_branch
        %398 = sbr.rel (%p396) target = $region48
      $region47: #{bert_output.1} parent=43 // pred_region
        _
      $region48: #{bert_output.1} parent=43 // pred_fallthru
        _
    $region44: #{bert_output.1} parent=5 // pred_fallthru
      _
    %p399 = scmp.le.s32.totalorder 2, %s12
    // Predicated region
    $region49: #{bert_output.1} parent=5 // pred_check
      %p400 = pneg %p399
    $region50: #{bert_output.1} parent=5 // pred_check_branch
      %402 = sbr.rel (%p400) target = $region52
    $region51: #{bert_output.1} parent=5 // pred_region
      %s403 = ssub.s32 %s12, 2
      // Predicated region
      $region53: #{bert_output.1} parent=51 // pred_check
        %p404 = pneg %p177
      $region54: #{bert_output.1} parent=51 // pred_check_branch
        %406 = sbr.rel (%p404) target = $region56
      $region55: #{bert_output.1} parent=51 // pred_region
        %p407 = scmp.lt.s32.totalorder %s18, 1
        %s408 = scalar_select %p407, %s18, 1
        %s409 = smul.addr %s408, 8
        %s410 = scalar_lea.vmem %s6, %s409
      $region56: #{bert_output.1} parent=51 // pred_fallthru
        _
    $region52: #{bert_output.1} parent=5 // pred_fallthru
      _
  $region6: #{bert_output.1} parent=0 // loop_footer
    %s16 = sadd.s32 1, %s12
  $region7: #{bert_output.1} parent=0 // loop_footer_branch
    %11 = sbr.rel target = $region3
  $region8: #{bert_output.1} parent=0 // loop_exit
    _

</llo_original>
